<compile_context>
chip_gen: v7x
topology: tpu7x:2x2x1
jax: 0.10.0
libtpu: 0.0.40
codegen_flags: <defaults>
</compile_context>

<pallas_src>
import math

import jax
import jax.numpy as jnp
from jax.experimental import pallas as pl
from jax.experimental.pallas import tpu as pltpu

LOG_SIG_MAX = 2.0
LOG_SIG_MIN = -20.0

LANE = 128  # TPU lane width; padded feature dims are multiples of this.


def _round_up(x, m):
    return ((x + m - 1) // m) * m


# ----------------------------------------------------------------------------- kernel
def gaussian_policy_kernel(
    x_ref,            # [TB, IN]      f32 (unpadded feature dim)
    w1_ref, b1_ref,   # [IN, H_P] bf16, [1, H_P] f32
    w2_ref, b2_ref,   # [H_P, H_P] bf16, [1, H_P] f32
    wh_ref, bh_ref,   # [H_P, HEAD_P] bf16, [1, HEAD_P] f32   (fused mean|log_std)
    lo_ref, hi_ref,   # [1, HEAD_P] f32 clamp vectors (-inf/+inf outside log_std cols)
    out_ref,          # [TB, HEAD_P] f32
):
    # h1 = relu(state @ W1 + b1) -- bf16 MXU operands, f32 accumulate.
    x = x_ref[...].astype(jnp.bfloat16)
    h1 = jnp.dot(x, w1_ref[...], preferred_element_type=jnp.float32) + b1_ref[...]
    h1 = jnp.maximum(h1, 0.0)

    # h2 = relu(h1 @ W2 + b2)
    h2 = jnp.dot(h1.astype(jnp.bfloat16), w2_ref[...],
                 preferred_element_type=jnp.float32) + b2_ref[...]
    h2 = jnp.maximum(h2, 0.0)

    # fused heads: columns [0, A) = mean, [A, 2A) = log_std, rest = zero padding
    head = jnp.dot(h2.astype(jnp.bfloat16), wh_ref[...],
                   preferred_element_type=jnp.float32) + bh_ref[...]

    # clamp only the log_std columns: lo/hi are -inf/+inf everywhere else.
    head = jnp.clip(head, lo_ref[...], hi_ref[...])

    out_ref[...] = head.astype(out_ref.dtype)


# ----------------------------------------------------------------------------- wrapper
def prepare_params(params, *, weight_dtype=jnp.bfloat16):
    """One-time layout plumbing: fuse heads, pad lane dims to 128, cast weights.

    Do this once per parameter update and reuse the result across forward calls.
    """
    num_inputs, hidden_dim = params["w1"].shape
    num_actions = params["wm"].shape[1]
    h_p = _round_up(hidden_dim, LANE)
    head_p = _round_up(2 * num_actions, LANE)

    w1 = jnp.zeros((num_inputs, h_p), weight_dtype).at[:, :hidden_dim].set(
        params["w1"].astype(weight_dtype))
    b1 = jnp.zeros((1, h_p), jnp.float32).at[:, :hidden_dim].set(params["b1"])
    w2 = jnp.zeros((h_p, h_p), weight_dtype).at[:hidden_dim, :hidden_dim].set(
        params["w2"].astype(weight_dtype))
    b2 = jnp.zeros((1, h_p), jnp.float32).at[:, :hidden_dim].set(params["b2"])

    wh = jnp.concatenate([params["wm"], params["ws"]], axis=1)   # [H, 2A]
    bh = jnp.concatenate([params["bm"], params["bs"]], axis=1)   # [1, 2A]
    wh = jnp.zeros((h_p, head_p), weight_dtype).at[:hidden_dim, :2 * num_actions].set(
        wh.astype(weight_dtype))
    bh = jnp.zeros((1, head_p), jnp.float32).at[:, :2 * num_actions].set(bh)

    lo = jnp.full((1, head_p), -jnp.inf, jnp.float32).at[
        :, num_actions:2 * num_actions].set(LOG_SIG_MIN)
    hi = jnp.full((1, head_p), jnp.inf, jnp.float32).at[
        :, num_actions:2 * num_actions].set(LOG_SIG_MAX)

    return {
        "w1": w1, "b1": b1, "w2": w2, "b2": b2, "wh": wh, "bh": bh,
        "lo": lo, "hi": hi,
        "num_inputs": int(num_inputs),
        "num_actions": int(num_actions),
        "h_p": int(h_p),
        "head_p": int(head_p),
    }


def gaussian_policy_forward(state, prepared, *, batch_tile=2048):
    """Pallas forward. state: [B, num_inputs] f32. Returns (mean, log_std)."""
    B, num_inputs = state.shape
    assert num_inputs == prepared["num_inputs"]
    num_actions = prepared["num_actions"]
    h_p = prepared["h_p"]
    head_p = prepared["head_p"]

    # Batch tile: multiple of 8 sublanes.  Cap so the grid has >= 2 steps when the
    # batch allows it (splits the "parallel" axis across v7x's two TensorCores).
    if B <= 8:
        tb = B
    else:
        tb = max(8, min(batch_tile, _round_up(pl.cdiv(B, 2), 8)))
    grid = (pl.cdiv(B, tb),)

    const = lambda i: (0, 0)   # weights/biases: resident in VMEM across grid steps

    out = pl.pallas_call(
        gaussian_policy_kernel,
        out_shape=jax.ShapeDtypeStruct((B, head_p), jnp.float32),
        grid=grid,
        in_specs=[
            pl.BlockSpec((tb, num_inputs), lambda i: (i, 0)),   # state tile (pipelined)
            pl.BlockSpec((num_inputs, h_p), const),
            pl.BlockSpec((1, h_p), const),
            pl.BlockSpec((h_p, h_p), const),
            pl.BlockSpec((1, h_p), const),
            pl.BlockSpec((h_p, head_p), const),
            pl.BlockSpec((1, head_p), const),
            pl.BlockSpec((1, head_p), const),
            pl.BlockSpec((1, head_p), const),
        ],
        out_specs=pl.BlockSpec((tb, head_p), lambda i: (i, 0)),
        compiler_params=pltpu.CompilerParams(
            dimension_semantics=("parallel",),
            vmem_limit_bytes=48 * 1024 * 1024,  # v5e default scoped VMEM is only 16 MiB
        ),
    )(state, prepared["w1"], prepared["b1"], prepared["w2"], prepared["b2"],
      prepared["wh"], prepared["bh"], prepared["lo"], prepared["hi"])

    mean = out[:, :num_actions]
    log_std = out[:, num_actions:2 * num_actions]
    return mean, log_std


# ----------------------------------------------------------------------------- init / ref
def xavier_uniform(key, fan_in, fan_out, gain=1.0):
    # matches torch.nn.init.xavier_uniform_ (gain=1); stored as [fan_in, fan_out]
    limit = gain * math.sqrt(6.0 / (fan_in + fan_out))
    return jax.random.uniform(
        key, (fan_in, fan_out), dtype=jnp.float32, minval=-limit, maxval=limit
    )


def init_params(key, num_inputs, num_actions, hidden_dim):
    k1, k2, k3, k4 = jax.random.split(key, 4)
    return {
        "w1": xavier_uniform(k1, num_inputs, hidden_dim),
        "b1": jnp.zeros((1, hidden_dim), jnp.float32),
        "w2": xavier_uniform(k2, hidden_dim, hidden_dim),
        "b2": jnp.zeros((1, hidden_dim), jnp.float32),
        "wm": xavier_uniform(k3, hidden_dim, num_actions),
        "bm": jnp.zeros((1, num_actions), jnp.float32),
        "ws": xavier_uniform(k4, hidden_dim, num_actions),
        "bs": jnp.zeros((1, num_actions), jnp.float32),
    }


def reference_forward(state, params):
    h1 = jnp.maximum(state @ params["w1"] + params["b1"], 0.0)
    h2 = jnp.maximum(h1 @ params["w2"] + params["b2"], 0.0)
    mean = h2 @ params["wm"] + params["bm"]
    log_std = jnp.clip(h2 @ params["ws"] + params["bs"], LOG_SIG_MIN, LOG_SIG_MAX)
    return mean, log_std


if __name__ == "__main__":
    key = jax.random.PRNGKey(0)
    k_param, k_state = jax.random.split(key)

    B, num_inputs, num_actions, hidden_dim = 8, 16, 8, 32
    params = init_params(k_param, num_inputs, num_actions, hidden_dim)
    prepared = prepare_params(params)          # one-time padding/fusion/bf16 cast
    state = jax.random.normal(k_state, (B, num_inputs), dtype=jnp.float32)

    mean, log_std = gaussian_policy_forward(state, prepared)
    jax.block_until_ready((mean, log_std))

    ref_mean, ref_log_std = reference_forward(state, params)
    assert mean.shape == (B, num_actions) and log_std.shape == (B, num_actions)
    # bf16 matmul operands => ~1e-2 relative deviation from the f32 reference.
    assert jnp.allclose(mean, ref_mean, atol=5e-2, rtol=5e-2)
    assert jnp.allclose(log_std, ref_log_std, atol=5e-2, rtol=5e-2)

    # Larger, non-multiple batch: exercises the non-divisible grid (masked writeback
    # of the partial last block) and the >=2-grid-step path.
    state_big = jax.random.normal(jax.random.PRNGKey(1), (1000, num_inputs), jnp.float32)
    mean_b, log_std_b = gaussian_policy_forward(state_big, prepared)
    jax.block_until_ready((mean_b, log_std_b))
    ref_mean_b, ref_log_std_b = reference_forward(state_big, params)
    assert mean_b.shape == (1000, num_actions)
    assert jnp.allclose(mean_b, ref_mean_b, atol=5e-2, rtol=5e-2)
    assert jnp.allclose(log_std_b, ref_log_std_b, atol=5e-2, rtol=5e-2)

    # TODO(synk): the stochastic `sample()` method (rsample + tanh squash + log_prob)
    # is not part of forward(); it is left to plain JAX if needed.
    print("KERNEL_OK")
</pallas_src>

<mosaic_0001>
module attributes {stable_mosaic.version = 11 : i64} {
  func.func @gaussian_policy_kernel(%arg0: i32, %arg1: memref<8x16xf32, #tpu.memory_space<vmem>>, %arg2: memref<16x128xbf16, #tpu.memory_space<vmem>>, %arg3: memref<1x128xf32, #tpu.memory_space<vmem>>, %arg4: memref<128x128xbf16, #tpu.memory_space<vmem>>, %arg5: memref<1x128xf32, #tpu.memory_space<vmem>>, %arg6: memref<128x128xbf16, #tpu.memory_space<vmem>>, %arg7: memref<1x128xf32, #tpu.memory_space<vmem>>, %arg8: memref<1x128xf32, #tpu.memory_space<vmem>>, %arg9: memref<1x128xf32, #tpu.memory_space<vmem>>, %arg10: memref<8x128xf32, #tpu.memory_space<vmem>>) attributes {dimension_semantics = [#tpu.dimension_semantics<parallel>], iteration_bounds = array<i64: 1>, scalar_prefetch = 0 : i64, scratch_operands = 0 : i64, tpu.core_type = #tpu.core_type<tc>, window_params = [{transform_indices = @transform_0, window_bounds = array<i64: 8, 16>}, {pipeline_mode = #tpu.pipeline_mode<synchronous>, transform_indices = @transform_1, window_bounds = array<i64: 16, 128>}, {pipeline_mode = #tpu.pipeline_mode<synchronous>, transform_indices = @transform_2, window_bounds = array<i64: 1, 128>}, {pipeline_mode = #tpu.pipeline_mode<synchronous>, transform_indices = @transform_3, window_bounds = array<i64: 128, 128>}, {pipeline_mode = #tpu.pipeline_mode<synchronous>, transform_indices = @transform_4, window_bounds = array<i64: 1, 128>}, {pipeline_mode = #tpu.pipeline_mode<synchronous>, transform_indices = @transform_5, window_bounds = array<i64: 128, 128>}, {pipeline_mode = #tpu.pipeline_mode<synchronous>, transform_indices = @transform_6, window_bounds = array<i64: 1, 128>}, {pipeline_mode = #tpu.pipeline_mode<synchronous>, transform_indices = @transform_7, window_bounds = array<i64: 1, 128>}, {pipeline_mode = #tpu.pipeline_mode<synchronous>, transform_indices = @transform_8, window_bounds = array<i64: 1, 128>}, {transform_indices = @transform_9, window_bounds = array<i64: 8, 128>}]} {
    %c0 = arith.constant 0 : index
    %c0_0 = arith.constant 0 : index
    %0 = vector.load %arg1[%c0, %c0_0] : memref<8x16xf32, #tpu.memory_space<vmem>>, vector<8x16xf32>
    %1 = arith.truncf %0 : vector<8x16xf32> to vector<8x16xbf16>
    %c0_1 = arith.constant 0 : index
    %c0_2 = arith.constant 0 : index
    %2 = vector.load %arg2[%c0_1, %c0_2] : memref<16x128xbf16, #tpu.memory_space<vmem>>, vector<16x128xbf16>
    %cst = arith.constant dense<0.000000e+00> : vector<8x128xf32>
    %3 = tpu.matmul %1, %2, %cst {dimension_numbers = #tpu.dot_dimension_numbers<[1], [0], [0], [1], [0, 0, 1, 1], [], []>} : vector<8x16xbf16>, vector<16x128xbf16>, vector<8x128xf32> -> vector<8x128xf32>
    %c0_3 = arith.constant 0 : index
    %c0_4 = arith.constant 0 : index
    %4 = vector.load %arg3[%c0_3, %c0_4] : memref<1x128xf32, #tpu.memory_space<vmem>>, vector<1x128xf32>
    %5 = vector.broadcast %4 : vector<1x128xf32> to vector<8x128xf32>
    %6 = arith.addf %3, %5 : vector<8x128xf32>
    %cst_5 = arith.constant 0.000000e+00 : f32
    %7 = vector.broadcast %cst_5 : f32 to vector<8x128xf32>
    %8 = arith.maximumf %6, %7 : vector<8x128xf32>
    %9 = arith.truncf %8 : vector<8x128xf32> to vector<8x128xbf16>
    %c0_6 = arith.constant 0 : index
    %c0_7 = arith.constant 0 : index
    %10 = vector.load %arg4[%c0_6, %c0_7] : memref<128x128xbf16, #tpu.memory_space<vmem>>, vector<128x128xbf16>
    %cst_8 = arith.constant dense<0.000000e+00> : vector<8x128xf32>
    %11 = tpu.matmul %9, %10, %cst_8 {dimension_numbers = #tpu.dot_dimension_numbers<[1], [0], [0], [1], [0, 0, 1, 1], [], []>} : vector<8x128xbf16>, vector<128x128xbf16>, vector<8x128xf32> -> vector<8x128xf32>
    %c0_9 = arith.constant 0 : index
    %c0_10 = arith.constant 0 : index
    %12 = vector.load %arg5[%c0_9, %c0_10] : memref<1x128xf32, #tpu.memory_space<vmem>>, vector<1x128xf32>
    %13 = vector.broadcast %12 : vector<1x128xf32> to vector<8x128xf32>
    %14 = arith.addf %11, %13 : vector<8x128xf32>
    %cst_11 = arith.constant 0.000000e+00 : f32
    %15 = vector.broadcast %cst_11 : f32 to vector<8x128xf32>
    %16 = arith.maximumf %14, %15 : vector<8x128xf32>
    %17 = arith.truncf %16 : vector<8x128xf32> to vector<8x128xbf16>
    %c0_12 = arith.constant 0 : index
    %c0_13 = arith.constant 0 : index
    %18 = vector.load %arg6[%c0_12, %c0_13] : memref<128x128xbf16, #tpu.memory_space<vmem>>, vector<128x128xbf16>
    %cst_14 = arith.constant dense<0.000000e+00> : vector<8x128xf32>
    %19 = tpu.matmul %17, %18, %cst_14 {dimension_numbers = #tpu.dot_dimension_numbers<[1], [0], [0], [1], [0, 0, 1, 1], [], []>} : vector<8x128xbf16>, vector<128x128xbf16>, vector<8x128xf32> -> vector<8x128xf32>
    %c0_15 = arith.constant 0 : index
    %c0_16 = arith.constant 0 : index
    %20 = vector.load %arg7[%c0_15, %c0_16] : memref<1x128xf32, #tpu.memory_space<vmem>>, vector<1x128xf32>
    %21 = vector.broadcast %20 : vector<1x128xf32> to vector<8x128xf32>
    %22 = arith.addf %19, %21 : vector<8x128xf32>
    %c0_17 = arith.constant 0 : index
    %c0_18 = arith.constant 0 : index
    %23 = vector.load %arg8[%c0_17, %c0_18] : memref<1x128xf32, #tpu.memory_space<vmem>>, vector<1x128xf32>
    %c0_19 = arith.constant 0 : index
    %c0_20 = arith.constant 0 : index
    %24 = vector.load %arg9[%c0_19, %c0_20] : memref<1x128xf32, #tpu.memory_space<vmem>>, vector<1x128xf32>
    %25 = vector.broadcast %23 : vector<1x128xf32> to vector<8x128xf32>
    %26 = arith.maximumf %25, %22 : vector<8x128xf32>
    %27 = vector.broadcast %24 : vector<1x128xf32> to vector<8x128xf32>
    %28 = arith.minimumf %27, %26 : vector<8x128xf32>
    %c0_21 = arith.constant 0 : index
    %c0_22 = arith.constant 0 : index
    %29 = vector.load %arg10[%c0_21, %c0_22] : memref<8x128xf32, #tpu.memory_space<vmem>>, vector<8x128xf32>
    tpu.vector_store %arg10[%c0_21, %c0_22], %28 {strides = array<i32>} : memref<8x128xf32, #tpu.memory_space<vmem>>, vector<8x128xf32>,
    return
  }
  func.func @transform_0(%arg0: i32) -> (i32, i32) {
    %c0_i32 = arith.constant 0 : i32
    %c0_i32_0 = arith.constant 0 : i32
    return %arg0, %c0_i32 : i32, i32
  }
  func.func @transform_1(%arg0: i32) -> (i32, i32) {
    %c0_i32 = arith.constant 0 : i32
    %c0_i32_0 = arith.constant 0 : i32
    %c0_i32_1 = arith.constant 0 : i32
    return %c0_i32, %c0_i32_0 : i32, i32
  }
  func.func @transform_2(%arg0: i32) -> (i32, i32) {
    %c0_i32 = arith.constant 0 : i32
    %c0_i32_0 = arith.constant 0 : i32
    %c0_i32_1 = arith.constant 0 : i32
    return %c0_i32, %c0_i32_0 : i32, i32
  }
  func.func @transform_3(%arg0: i32) -> (i32, i32) {
    %c0_i32 = arith.constant 0 : i32
    %c0_i32_0 = arith.constant 0 : i32
    %c0_i32_1 = arith.constant 0 : i32
    return %c0_i32, %c0_i32_0 : i32, i32
  }
  func.func @transform_4(%arg0: i32) -> (i32, i32) {
    %c0_i32 = arith.constant 0 : i32
    %c0_i32_0 = arith.constant 0 : i32
    %c0_i32_1 = arith.constant 0 : i32
    return %c0_i32, %c0_i32_0 : i32, i32
  }
  func.func @transform_5(%arg0: i32) -> (i32, i32) {
    %c0_i32 = arith.constant 0 : i32
    %c0_i32_0 = arith.constant 0 : i32
    %c0_i32_1 = arith.constant 0 : i32
    return %c0_i32, %c0_i32_0 : i32, i32
  }
  func.func @transform_6(%arg0: i32) -> (i32, i32) {
    %c0_i32 = arith.constant 0 : i32
    %c0_i32_0 = arith.constant 0 : i32
    %c0_i32_1 = arith.constant 0 : i32
    return %c0_i32, %c0_i32_0 : i32, i32
  }
  func.func @transform_7(%arg0: i32) -> (i32, i32) {
    %c0_i32 = arith.constant 0 : i32
    %c0_i32_0 = arith.constant 0 : i32
    %c0_i32_1 = arith.constant 0 : i32
    return %c0_i32, %c0_i32_0 : i32, i32
  }
  func.func @transform_8(%arg0: i32) -> (i32, i32) {
    %c0_i32 = arith.constant 0 : i32
    %c0_i32_0 = arith.constant 0 : i32
    %c0_i32_1 = arith.constant 0 : i32
    return %c0_i32, %c0_i32_0 : i32, i32
  }
  func.func @transform_9(%arg0: i32) -> (i32, i32) {
    %c0_i32 = arith.constant 0 : i32
    %c0_i32_0 = arith.constant 0 : i32
    return %arg0, %c0_i32 : i32, i32
  }
}

</mosaic_0001>

<llo_original>
// kernel: tpu_custom_call.1
$region0: #{tpu_custom_call.1}
  #allocation0 [shape = 'u32[]', space=smem, size = 0x4, offset = 0x4, fixed_abs, tag = 'smem constant byte address 0x4 - core index']
  #allocation1 [shape = 'u32[144,128]{1,0:T(1,128)}', space=vmem, size = 0x12000, scoped, tag = 'internal scratch']
  %s0 = inlined_call_operand.hbm [shape: f32[8,16], index: 0, kind: input, shape index: {}]
  %s1 = inlined_call_operand.hbm [shape: bf16[16,128], index: 1, kind: input, shape index: {}]
  %s2 = inlined_call_operand.vmem [shape: f32[1,128], index: 2, kind: input, shape index: {}]
  %s3 = inlined_call_operand.hbm [shape: bf16[128,128], index: 3, kind: input, shape index: {}]
  %s4 = inlined_call_operand.vmem [shape: f32[1,128], index: 4, kind: input, shape index: {}]
  %s5 = inlined_call_operand.hbm [shape: bf16[128,128], index: 5, kind: input, shape index: {}]
  %s6 = inlined_call_operand.vmem [shape: f32[1,128], index: 6, kind: input, shape index: {}]
  %s7 = inlined_call_operand.vmem [shape: f32[1,128], index: 7, kind: input, shape index: {}]
  %s8 = inlined_call_operand.vmem [shape: f32[1,128], index: 8, kind: input, shape index: {}]
  %s9 = inlined_call_operand.hbm [shape: f32[8,128], index: 9, kind: output, shape index: {}]
  %s10 = sld [smem:[#allocation0]]
  $region62: #{tpu_custom_call.1} parent=0
    _
  %s12 = ssub.s32 1, %s10
  %s13 = scalar_select 0, %s12, %s10
  $region1: #{tpu_custom_call.1} parent=0
    #allocation2 [shape = 'u8[4096]{0}', space=vmem, size = 0x1000, scoped, tag = 'input window, operand 0, single buffered']
    #allocation3 [shape = 's32[1]{0}', space=sflag, size = 0x4, scoped, tag = 'scoped memory for tpu_custom_call.1']
    #allocation4 [shape = 's32[1]{0}', space=sflag, size = 0x4, scoped, tag = 'scoped memory for tpu_custom_call.1']
    #allocation5 [shape = 'u8[4096]{0}', space=vmem, size = 0x1000, scoped, tag = 'input window, operand 1, single buffered']
    #allocation6 [shape = 's32[1]{0}', space=sflag, size = 0x4, scoped, tag = 'scoped memory for tpu_custom_call.1']
    #allocation7 [shape = 'u8[32768]{0}', space=vmem, size = 0x8000, scoped, tag = 'input window, operand 3, single buffered']
    #allocation8 [shape = 'u8[32768]{0}', space=vmem, size = 0x8000, scoped, tag = 'input window, operand 5, single buffered']
    #allocation9 [shape = 's32[1]{0}', space=sflag, size = 0x4, scoped, tag = 'scoped memory for tpu_custom_call.1']
    #allocation10 [shape = 'u8[4096]{0}', space=vmem, size = 0x1000, scoped, tag = 'output window, operand 0, single buffered']
    %14 = vsyncpa [#allocation3], 0
    %15 = vsyncpa [#allocation6], 0
    %16 = vsyncpa [#allocation9], 0
    %17 = vsyncpa [#allocation4], 0
    // Predicated region
    $region2: #{tpu_custom_call.1} parent=1 // pred_check
      _
    $region3: #{tpu_custom_call.1} parent=1 // pred_check_branch
      %19 = sbr.rel (0) target = $region5
    $region4: #{tpu_custom_call.1} parent=1 // pred_region
      %s21 = ssub.s32 128, 128
      %22 = vsyncadd [#allocation3], %s21
      %s24 = sshll.u32 [#allocation2], 4
      %s25 = int_to_ptr.vmem [resolvable:$true] %s24
      %27 = dma.hbm_to_vmem [thread:$0]  %s0, 128, %s25, [#allocation3]
    $region5: #{tpu_custom_call.1} parent=1 // pred_fallthru
      _
    // Predicated region
    $region6: #{tpu_custom_call.1} parent=1 // pred_check
      _
    $region7: #{tpu_custom_call.1} parent=1 // pred_check_branch
      %29 = sbr.rel (0) target = $region9
    $region8: #{tpu_custom_call.1} parent=1 // pred_region
      %s31 = ssub.s32 128, 128
      %32 = vsyncadd [#allocation6], %s31
      %s33 = sshll.u32 [#allocation5], 4
      %s34 = int_to_ptr.vmem [resolvable:$true] %s33
      %39 = dma.hbm_to_vmem [thread:$0]  %s1, 128, %s34, [#allocation6], 64, 64, 4
    $region9: #{tpu_custom_call.1} parent=1 // pred_fallthru
      _
    // Predicated region
    $region10: #{tpu_custom_call.1} parent=1 // pred_check
      _
    $region11: #{tpu_custom_call.1} parent=1 // pred_check_branch
      %41 = sbr.rel (0) target = $region13
    $region12: #{tpu_custom_call.1} parent=1 // pred_region
      _
    $region13: #{tpu_custom_call.1} parent=1 // pred_fallthru
      _
    // Predicated region
    $region14: #{tpu_custom_call.1} parent=1 // pred_check
      _
    $region15: #{tpu_custom_call.1} parent=1 // pred_check_branch
      %43 = sbr.rel (0) target = $region17
    $region16: #{tpu_custom_call.1} parent=1 // pred_region
      %s45 = ssub.s32 1024, 1024
      %46 = vsyncadd [#allocation6], %s45
      %s47 = sshll.u32 [#allocation7], 4
      %s48 = int_to_ptr.vmem [resolvable:$true] %s47
      %53 = dma.hbm_to_vmem [thread:$0]  %s3, 1024, %s48, [#allocation6], 64, 64, 4
    $region17: #{tpu_custom_call.1} parent=1 // pred_fallthru
      _
    // Predicated region
    $region18: #{tpu_custom_call.1} parent=1 // pred_check
      _
    $region19: #{tpu_custom_call.1} parent=1 // pred_check_branch
      %55 = sbr.rel (0) target = $region21
    $region20: #{tpu_custom_call.1} parent=1 // pred_region
      _
    $region21: #{tpu_custom_call.1} parent=1 // pred_fallthru
      _
    // Predicated region
    $region22: #{tpu_custom_call.1} parent=1 // pred_check
      _
    $region23: #{tpu_custom_call.1} parent=1 // pred_check_branch
      %57 = sbr.rel (0) target = $region25
    $region24: #{tpu_custom_call.1} parent=1 // pred_region
      %s59 = ssub.s32 1024, 1024
      %60 = vsyncadd [#allocation9], %s59
      %s61 = sshll.u32 [#allocation8], 4
      %s62 = int_to_ptr.vmem [resolvable:$true] %s61
      %67 = dma.hbm_to_vmem [thread:$0]  %s5, 1024, %s62, [#allocation9], 64, 64, 4
    $region25: #{tpu_custom_call.1} parent=1 // pred_fallthru
      _
    // Predicated region
    $region26: #{tpu_custom_call.1} parent=1 // pred_check
      _
    $region27: #{tpu_custom_call.1} parent=1 // pred_check_branch
      %69 = sbr.rel (0) target = $region29
    $region28: #{tpu_custom_call.1} parent=1 // pred_region
      _
    $region29: #{tpu_custom_call.1} parent=1 // pred_fallthru
      _
    // Predicated region
    $region30: #{tpu_custom_call.1} parent=1 // pred_check
      _
    $region31: #{tpu_custom_call.1} parent=1 // pred_check_branch
      %71 = sbr.rel (0) target = $region33
    $region32: #{tpu_custom_call.1} parent=1 // pred_region
      _
    $region33: #{tpu_custom_call.1} parent=1 // pred_fallthru
      _
    // Predicated region
    $region34: #{tpu_custom_call.1} parent=1 // pred_check
      _
    $region35: #{tpu_custom_call.1} parent=1 // pred_check_branch
      %73 = sbr.rel (0) target = $region37
    $region36: #{tpu_custom_call.1} parent=1 // pred_region
      _
    $region37: #{tpu_custom_call.1} parent=1 // pred_fallthru
      _
    // Predicated region
    $region38: #{tpu_custom_call.1} parent=1 // pred_check
      _
    $region39: #{tpu_custom_call.1} parent=1 // pred_check_branch
      %75 = sbr.rel (0) target = $region41
    $region40: #{tpu_custom_call.1} parent=1 // pred_region
      %76 = dma.done [#allocation3], 128
    $region41: #{tpu_custom_call.1} parent=1 // pred_fallthru
      _
    // Predicated region
    $region42: #{tpu_custom_call.1} parent=1 // pred_check
      _
    $region43: #{tpu_custom_call.1} parent=1 // pred_check_branch
      %78 = sbr.rel (0) target = $region45
    $region44: #{tpu_custom_call.1} parent=1 // pred_region
      %79 = dma.done [#allocation6], 128
    $region45: #{tpu_custom_call.1} parent=1 // pred_fallthru
      _
    // Predicated region
    $region46: #{tpu_custom_call.1} parent=1 // pred_check
      _
    $region47: #{tpu_custom_call.1} parent=1 // pred_check_branch
      %81 = sbr.rel (0) target = $region49
    $region48: #{tpu_custom_call.1} parent=1 // pred_region
      %82 = dma.done [#allocation6], 1024
    $region49: #{tpu_custom_call.1} parent=1 // pred_fallthru
      _
    // Predicated region
    $region50: #{tpu_custom_call.1} parent=1 // pred_check
      _
    $region51: #{tpu_custom_call.1} parent=1 // pred_check_branch
      %84 = sbr.rel (0) target = $region53
    $region52: #{tpu_custom_call.1} parent=1 // pred_region
      %85 = dma.done [#allocation9], 1024
    $region53: #{tpu_custom_call.1} parent=1 // pred_fallthru
      _
    %v87 = vld [vmem:[#allocation2] sm:$0xff]
    %v88 = vpack.c.bf16 %v87, %v87
    %v89 = vld [vmem:[#allocation5] sm:$0xf]
    %v90 = vld [vmem:[#allocation5 + $0x4] sm:$0xf]
    %v91 = vld [vmem:[%s2] sm:$0x1]
    %v93 = vlaneseq
    %v94 = vshrl.u32 %v93, 7
    %v95 = vsub.s32 0, %v94
    %v96 = vrot.slane %v91, %v95
    %v100 = vunpack.c.l.b16 %v89
    %v101 = vunpack.c.l.b16 %v90
    %v102 = vpack.c.b16 %v101, %v100
    %vm104 = vcmask 130048
    %v106 = vsel %vm104, %v88, 0
    %108 = vmatprep.subr.bf16.mxu0 0
    %109 = vmatpush1.bf16.msra.mxu0 %v102
    %110 = vmatprep.subr.bf16.mxu0 0
    %111 = vmatpush1.bf16.msra.mxu0 0
    %112 = vmatprep.subr.bf16.mxu0 0
    %113 = vmatpush1.bf16.msra.mxu0 0
    %114 = vmatprep.subr.bf16.mxu0 0
    %115 = vmatpush1.bf16.msra.mxu0 0
    %116 = vmatprep.subr.bf16.mxu0 0
    %117 = vmatpush1.bf16.msra.mxu0 0
    %118 = vmatprep.subr.bf16.mxu0 0
    %119 = vmatpush1.bf16.msra.mxu0 0
    %120 = vmatprep.subr.bf16.mxu0 0
    %121 = vmatpush1.bf16.msra.mxu0 0
    %122 = vmatprep.subr.bf16.mxu0 0
    %123 = vmatpush1.bf16.msra.mxu0 0
    %124 = vmatprep.subr.bf16.mxu0 0
    %125 = vmatpush1.bf16.msra.mxu0 0
    %126 = vmatprep.subr.bf16.mxu0 0
    %127 = vmatpush1.bf16.msra.mxu0 0
    %128 = vmatprep.subr.bf16.mxu0 0
    %129 = vmatpush1.bf16.msra.mxu0 0
    %130 = vmatprep.subr.bf16.mxu0 0
    %131 = vmatpush1.bf16.msra.mxu0 0
    %132 = vmatprep.subr.bf16.mxu0 0
    %133 = vmatpush1.bf16.msra.mxu0 0
    %134 = vmatprep.subr.bf16.mxu0 0
    %135 = vmatpush1.bf16.msra.mxu0 0
    %136 = vmatprep.subr.bf16.mxu0 0
    %137 = vmatpush1.bf16.msra.mxu0 0
    %138 = vmatprep.subr.bf16.mxu0 0
    %139 = vmatpush1.bf16.msra.mxu0 0
    %140 = vmatprep.mubr.bf16.mxu0 0
    %141 = vmatmul.mubr.bf16.gmra.mrb[0].mxu0 %v106
    %v142 = vpop.f32.mrb[0].mxu0
    %v143 = vadd.f32 %v96, %v142
    %v144 = vpop.f32.mrb[0].mxu0
    %v145 = vpop.f32.mrb[0].mxu0
    %v146 = vpop.f32.mrb[0].mxu0
    %147 = vdwg.mxu0
    %v148 = vmax.f32 %v143, 0.0
    %v149 = vpack.c.bf16 %v148, %v148
    %v150 = vld [vmem:[#allocation7] sm:$0xf]
    %v151 = vld [vmem:[#allocation7 + $0x4] sm:$0xf]
    %v152 = vld [vmem:[#allocation7 + $0x8] sm:$0xf]
    %v153 = vld [vmem:[#allocation7 + $0xc] sm:$0xf]
    %v154 = vld [vmem:[#allocation7 + $0x10] sm:$0xf]
    %v155 = vld [vmem:[#allocation7 + $0x14] sm:$0xf]
    %v156 = vld [vmem:[#allocation7 + $0x18] sm:$0xf]
    %v157 = vld [vmem:[#allocation7 + $0x1c] sm:$0xf]
    %v158 = vld [vmem:[#allocation7 + $0x20] sm:$0xf]
    %v159 = vld [vmem:[#allocation7 + $0x24] sm:$0xf]
    %v160 = vld [vmem:[#allocation7 + $0x28] sm:$0xf]
    %v161 = vld [vmem:[#allocation7 + $0x2c] sm:$0xf]
    %v162 = vld [vmem:[#allocation7 + $0x30] sm:$0xf]
    %v163 = vld [vmem:[#allocation7 + $0x34] sm:$0xf]
    %v164 = vld [vmem:[#allocation7 + $0x38] sm:$0xf]
    %v165 = vld [vmem:[#allocation7 + $0x3c] sm:$0xf]
    %v166 = vld [vmem:[%s4] sm:$0x1]
    %v168 = vlaneseq
    %v169 = vshrl.u32 %v168, 7
    %v170 = vsub.s32 0, %v169
    %v171 = vrot.slane %v166, %v170
    %v189 = vunpack.c.l.b16 %v150
    %v190 = vunpack.c.l.b16 %v151
    %v191 = vunpack.c.l.b16 %v152
    %v192 = vunpack.c.l.b16 %v153
    %v193 = vunpack.c.l.b16 %v154
    %v194 = vunpack.c.l.b16 %v155
    %v195 = vunpack.c.l.b16 %v156
    %v196 = vunpack.c.l.b16 %v157
    %v197 = vunpack.c.l.b16 %v158
    %v198 = vunpack.c.l.b16 %v159
    %v199 = vunpack.c.l.b16 %v160
    %v200 = vunpack.c.l.b16 %v161
    %v201 = vunpack.c.l.b16 %v162
    %v202 = vunpack.c.l.b16 %v163
    %v203 = vunpack.c.l.b16 %v164
    %v204 = vunpack.c.l.b16 %v165
    %v205 = vpack.c.b16 %v190, %v189
    %v206 = vpack.c.b16 %v192, %v191
    %v207 = vpack.c.b16 %v194, %v193
    %v208 = vpack.c.b16 %v196, %v195
    %v209 = vpack.c.b16 %v198, %v197
    %v210 = vpack.c.b16 %v200, %v199
    %v211 = vpack.c.b16 %v202, %v201
    %v212 = vpack.c.b16 %v204, %v203
    %221 = vmatprep.subr.bf16.mxu0 0
    %222 = vmatpush1.bf16.msra.mxu0 %v205
    %223 = vmatprep.subr.bf16.mxu0 0
    %224 = vmatpush1.bf16.msra.mxu0 %v206
    %225 = vmatprep.subr.bf16.mxu0 0
    %226 = vmatpush1.bf16.msra.mxu0 %v207
    %227 = vmatprep.subr.bf16.mxu0 0
    %228 = vmatpush1.bf16.msra.mxu0 %v208
    %229 = vmatprep.subr.bf16.mxu0 0
    %230 = vmatpush1.bf16.msra.mxu0 %v209
    %231 = vmatprep.subr.bf16.mxu0 0
    %232 = vmatpush1.bf16.msra.mxu0 %v210
    %233 = vmatprep.subr.bf16.mxu0 0
    %234 = vmatpush1.bf16.msra.mxu0 %v211
    %235 = vmatprep.subr.bf16.mxu0 0
    %236 = vmatpush1.bf16.msra.mxu0 %v212
    %237 = vmatprep.subr.bf16.mxu0 0
    %238 = vmatpush1.bf16.msra.mxu0 0
    %239 = vmatprep.subr.bf16.mxu0 0
    %240 = vmatpush1.bf16.msra.mxu0 0
    %241 = vmatprep.subr.bf16.mxu0 0
    %242 = vmatpush1.bf16.msra.mxu0 0
    %243 = vmatprep.subr.bf16.mxu0 0
    %244 = vmatpush1.bf16.msra.mxu0 0
    %245 = vmatprep.subr.bf16.mxu0 0
    %246 = vmatpush1.bf16.msra.mxu0 0
    %247 = vmatprep.subr.bf16.mxu0 0
    %248 = vmatpush1.bf16.msra.mxu0 0
    %249 = vmatprep.subr.bf16.mxu0 0
    %250 = vmatpush1.bf16.msra.mxu0 0
    %251 = vmatprep.subr.bf16.mxu0 0
    %252 = vmatpush1.bf16.msra.mxu0 0
    %253 = vmatprep.mubr.bf16.mxu0 0
    %254 = vmatmul.mubr.bf16.gmra.mrb[0].mxu0 %v149
    %v255 = vpop.f32.mrb[0].mxu0
    %v256 = vadd.f32 %v171, %v255
    %v257 = vpop.f32.mrb[0].mxu0
    %v258 = vpop.f32.mrb[0].mxu0
    %v259 = vpop.f32.mrb[0].mxu0
    %260 = vdwg.mxu0
    %v261 = vmax.f32 %v256, 0.0
    %v262 = vpack.c.bf16 %v261, %v261
    %v263 = vld [vmem:[#allocation8] sm:$0xf]
    %v264 = vld [vmem:[#allocation8 + $0x4] sm:$0xf]
    %v265 = vld [vmem:[#allocation8 + $0x8] sm:$0xf]
    %v266 = vld [vmem:[#allocation8 + $0xc] sm:$0xf]
    %v267 = vld [vmem:[#allocation8 + $0x10] sm:$0xf]
    %v268 = vld [vmem:[#allocation8 + $0x14] sm:$0xf]
    %v269 = vld [vmem:[#allocation8 + $0x18] sm:$0xf]
    %v270 = vld [vmem:[#allocation8 + $0x1c] sm:$0xf]
    %v271 = vld [vmem:[#allocation8 + $0x20] sm:$0xf]
    %v272 = vld [vmem:[#allocation8 + $0x24] sm:$0xf]
    %v273 = vld [vmem:[#allocation8 + $0x28] sm:$0xf]
    %v274 = vld [vmem:[#allocation8 + $0x2c] sm:$0xf]
    %v275 = vld [vmem:[#allocation8 + $0x30] sm:$0xf]
    %v276 = vld [vmem:[#allocation8 + $0x34] sm:$0xf]
    %v277 = vld [vmem:[#allocation8 + $0x38] sm:$0xf]
    %v278 = vld [vmem:[#allocation8 + $0x3c] sm:$0xf]
    %v279 = vld [vmem:[%s6] sm:$0x1]
    %v281 = vlaneseq
    %v282 = vshrl.u32 %v281, 7
    %v283 = vsub.s32 0, %v282
    %v284 = vrot.slane %v279, %v283
    %v302 = vunpack.c.l.b16 %v263
    %v303 = vunpack.c.l.b16 %v264
    %v304 = vunpack.c.l.b16 %v265
    %v305 = vunpack.c.l.b16 %v266
    %v306 = vunpack.c.l.b16 %v267
    %v307 = vunpack.c.l.b16 %v268
    %v308 = vunpack.c.l.b16 %v269
    %v309 = vunpack.c.l.b16 %v270
    %v310 = vunpack.c.l.b16 %v271
    %v311 = vunpack.c.l.b16 %v272
    %v312 = vunpack.c.l.b16 %v273
    %v313 = vunpack.c.l.b16 %v274
    %v314 = vunpack.c.l.b16 %v275
    %v315 = vunpack.c.l.b16 %v276
    %v316 = vunpack.c.l.b16 %v277
    %v317 = vunpack.c.l.b16 %v278
    %v318 = vpack.c.b16 %v303, %v302
    %v319 = vpack.c.b16 %v305, %v304
    %v320 = vpack.c.b16 %v307, %v306
    %v321 = vpack.c.b16 %v309, %v308
    %v322 = vpack.c.b16 %v311, %v310
    %v323 = vpack.c.b16 %v313, %v312
    %v324 = vpack.c.b16 %v315, %v314
    %v325 = vpack.c.b16 %v317, %v316
    %334 = vmatprep.subr.bf16.mxu0 0
    %335 = vmatpush1.bf16.msra.mxu0 %v318
    %336 = vmatprep.subr.bf16.mxu0 0
    %337 = vmatpush1.bf16.msra.mxu0 %v319
    %338 = vmatprep.subr.bf16.mxu0 0
    %339 = vmatpush1.bf16.msra.mxu0 %v320
    %340 = vmatprep.subr.bf16.mxu0 0
    %341 = vmatpush1.bf16.msra.mxu0 %v321
    %342 = vmatprep.subr.bf16.mxu0 0
    %343 = vmatpush1.bf16.msra.mxu0 %v322
    %344 = vmatprep.subr.bf16.mxu0 0
    %345 = vmatpush1.bf16.msra.mxu0 %v323
    %346 = vmatprep.subr.bf16.mxu0 0
    %347 = vmatpush1.bf16.msra.mxu0 %v324
    %348 = vmatprep.subr.bf16.mxu0 0
    %349 = vmatpush1.bf16.msra.mxu0 %v325
    %350 = vmatprep.subr.bf16.mxu0 0
    %351 = vmatpush1.bf16.msra.mxu0 0
    %352 = vmatprep.subr.bf16.mxu0 0
    %353 = vmatpush1.bf16.msra.mxu0 0
    %354 = vmatprep.subr.bf16.mxu0 0
    %355 = vmatpush1.bf16.msra.mxu0 0
    %356 = vmatprep.subr.bf16.mxu0 0
    %357 = vmatpush1.bf16.msra.mxu0 0
    %358 = vmatprep.subr.bf16.mxu0 0
    %359 = vmatpush1.bf16.msra.mxu0 0
    %360 = vmatprep.subr.bf16.mxu0 0
    %361 = vmatpush1.bf16.msra.mxu0 0
    %362 = vmatprep.subr.bf16.mxu0 0
    %363 = vmatpush1.bf16.msra.mxu0 0
    %364 = vmatprep.subr.bf16.mxu0 0
    %365 = vmatpush1.bf16.msra.mxu0 0
    %366 = vmatprep.mubr.bf16.mxu0 0
    %367 = vmatmul.mubr.bf16.gmra.mrb[0].mxu0 %v262
    %v368 = vpop.f32.mrb[0].mxu0
    %v369 = vadd.f32 %v284, %v368
    %v370 = vpop.f32.mrb[0].mxu0
    %v371 = vpop.f32.mrb[0].mxu0
    %v372 = vpop.f32.mrb[0].mxu0
    %373 = vdwg.mxu0
    %v374 = vld [vmem:[%s7] sm:$0x1]
    %v375 = vld [vmem:[%s8] sm:$0x1]
    %v377 = vlaneseq
    %v378 = vshrl.u32 %v377, 7
    %v379 = vsub.s32 0, %v378
    %v380 = vrot.slane %v374, %v379
    %v382 = vmax.f32 %v380, %v369
    %v384 = vlaneseq
    %v385 = vshrl.u32 %v384, 7
    %v386 = vsub.s32 0, %v385
    %v387 = vrot.slane %v375, %v386
    %v389 = vmin.f32 %v387, %v382
    %390 = vst [vmem:[#allocation10] sm:$0xff] %v389
    // Predicated region
    $region54: #{tpu_custom_call.1} parent=1 // pred_check
      _
    $region55: #{tpu_custom_call.1} parent=1 // pred_check_branch
      %392 = sbr.rel (0) target = $region57
    $region56: #{tpu_custom_call.1} parent=1 // pred_region
      %s394 = ssub.s32 128, 128
      %395 = vsyncadd [#allocation4], %s394
      %s397 = sshll.u32 [#allocation10], 4
      %s398 = int_to_ptr.vmem [resolvable:$true] %s397
      %400 = dma.vmem_to_hbm [thread:$0]  %s398, 128, %s9, [#allocation4]
    $region57: #{tpu_custom_call.1} parent=1 // pred_fallthru
      _
    // Predicated region
    $region58: #{tpu_custom_call.1} parent=1 // pred_check
      _
    $region59: #{tpu_custom_call.1} parent=1 // pred_check_branch
      %402 = sbr.rel (0) target = $region61
    $region60: #{tpu_custom_call.1} parent=1 // pred_region
      %403 = dma.done [#allocation4], 128
    $region61: #{tpu_custom_call.1} parent=1 // pred_fallthru
      _
    %404 = vsyncpa [#allocation3], 1
    %405 = vsyncpa [#allocation6], 1
    %406 = vsyncpa [#allocation9], 1
    %407 = vsyncpa [#allocation4], 1

</llo_original>
